<compile_context>
chip_gen: v7x
topology: tpu7x:2x2x1
jax: 0.10.0
libtpu: 0.0.40
codegen_flags: <defaults>
</compile_context>

<pallas_src>
import functools
import math

import jax
import jax.numpy as jnp
import numpy as np
from jax.experimental import pallas as pl
from jax.experimental.pallas import tpu as pltpu

N_FOODS = 16            # synthetic read_foods_tensor() stand-in
N_NUTRITION_COLS = 5    # FRUIT, VEGETABLE, CHEESE, MEAT, CEREAL (unused here)
VEGETARIAN_COL = 5      # FP.VEGETARIAN
VEGAN_COL = 6           # FP.VEGAN
PREF_PENALTY = 2.0
LANES = 128
PAD_VALUE = -1000.0     # far from every Gaussian center; survives round_and_bound


def _preference_kernel(pred_ref, true_ref, out_ref, *, terms, exact_match):
    # pred_ref : VMEM (1, TR, 128) f32  raw predicted ids tile
    # true_ref : VMEM (1, TR, 128) f32  gold ids tile
    # out_ref  : VMEM (1, 1, 4, 128) f32 resident per-(split,batch) lane partials:
    #            rows = [gbv(gold)_veg, gbv(pred)_veg, gbv(gold)_vegan, gbv(pred)_vegan]
    # terms    : tuple per category of (v, 10*i*v) trace-time Python floats,
    #            inactive (v == 0) foods already pruned.
    t = pl.program_id(2)

    @pl.when(t == 0)
    def _init():
        out_ref[...] = jnp.zeros_like(out_ref)

    pred = pred_ref[0]          # (TR, 128)
    gold = true_ref[0]          # (TR, 128)

    # round_and_bound(x) = round(x) * sigmoid(50 * (222.5 - round(x))).
    # 1/(1+exp(-z)) is exact across the range: exp overflow -> inf -> 0,
    # underflow -> 1.  (Do NOT use approx reciprocal here.)
    # TODO(synk): straight-through-estimator backward is not attached (forward-only kernel).
    r = jnp.round(pred)
    z = 50.0 * (222.5 - r)
    pred_rb = r / (1.0 + jnp.exp(-z))

    # Hoist the 1/0.01 scale: -(x - c)^2 * 100 == -(10x - 10c)^2.
    pred10 = pred_rb * 10.0
    gold10 = gold * 10.0

    for c, cat_terms in enumerate(terms):       # FP.VEGETARIAN, FP.VEGAN
        acc_g = jnp.zeros_like(gold10)
        acc_p = jnp.zeros_like(pred10)
        for v, c10 in cat_terms:                # fully unrolled, constants baked in
            dg = gold10 - c10
            dp = pred10 - c10
            if exact_match:
                # exp(-100*d^2) <= 4e-44 for |d| >= 1: equality compare is
                # numerically identical for integer-valued ids << 222.
                eg = jnp.where(dg == 0.0, 1.0, 0.0)
                ep = jnp.where(dp == 0.0, 1.0, 0.0)
            else:
                eg = jnp.exp(-(dg * dg))
                ep = jnp.exp(-(dp * dp))
            if v != 1.0:                        # drop the multiply for 0/1 flags
                eg = v * eg
                ep = v * ep
            acc_g = acc_g + eg
            acc_p = acc_p + ep
        # Sublane (XLU) reduce to (1,128), accumulate into the resident output.
        out_ref[0, 0, 2 * c + 0:2 * c + 1, :] += jnp.sum(acc_g, axis=0, keepdims=True)
        out_ref[0, 0, 2 * c + 1:2 * c + 2, :] += jnp.sum(acc_p, axis=0, keepdims=True)


def preference_loss(y_pred, y, data, *, veg_col=VEGETARIAN_COL, vegan_col=VEGAN_COL,
                    exact_integer_ids=False, tile_rows_max=16):
    """Pallas implementation of PreferenceLoss.forward(y_pred, y).

    `data` must be concrete (not a tracer): the two preference columns are
    baked into the kernel at trace time.
    """
    pred_ids = y_pred[..., 0].astype(jnp.float32)
    true_ids = y[..., 0].astype(jnp.float32)
    B = pred_ids.shape[0]
    S = int(math.prod(pred_ids.shape[1:]))

    # Bake preference flags as trace-time constants; prune v == 0 foods.
    data_np = np.asarray(jax.device_get(data), dtype=np.float32)
    terms = []
    for col in (veg_col, vegan_col):
        cat = []
        for i in range(data_np.shape[0]):
            v = float(data_np[i, col])
            if v != 0.0:
                cat.append((v, 10.0 * float(i) * v))
        terms.append(tuple(cat))
    terms = tuple(terms)

    # Lane/sublane-dense layout: (B, S) -> (B, rows, 128), rows a tile multiple.
    rows = -(-S // LANES)
    rows = -(-rows // 8) * 8
    tile_rows = min(rows, int(tile_rows_max))       # small tiles: no spill risk
    rows = -(-rows // tile_rows) * tile_rows
    padded = rows * LANES

    def prep(x):
        flat = x.reshape(B, S)
        if padded != S:
            flat = jnp.pad(flat, ((0, 0), (0, padded - S)),
                           constant_values=PAD_VALUE)
        return flat.reshape(B, rows, LANES)

    pred3 = prep(pred_ids)
    true3 = prep(true_ids)

    n_tiles = rows // tile_rows
    # v7x megacore: guarantee >= 2 parallel iterations; split the spatial axis
    # across cores when the batch axis cannot provide them.
    n_par = 2 if (B == 1 and n_tiles >= 2 and n_tiles % 2 == 0) else 1
    tiles_per_par = n_tiles // n_par

    n_active = sum(len(t) for t in terms)
    elems = B * padded
    trans_per_elem = (0 if exact_integer_ids else 2 * n_active) + 1
    cost = pl.CostEstimate(
        flops=int(elems * (8 * n_active + 12)),
        transcendentals=int(elems * trans_per_elem),
        bytes_accessed=int(2 * elems * 4 + n_par * B * 4 * LANES * 4),
    )

    kernel = functools.partial(_preference_kernel, terms=terms,
                               exact_match=exact_integer_ids)
    in_map = lambda s, b, t: (b, s * tiles_per_par + t, 0)

    lane_sums = pl.pallas_call(
        kernel,
        out_shape=jax.ShapeDtypeStruct((n_par, B, 4, LANES), jnp.float32),
        grid_spec=pltpu.PrefetchScalarGridSpec(
            num_scalar_prefetch=0,
            grid=(n_par, B, tiles_per_par),
            in_specs=[
                pl.BlockSpec((1, tile_rows, LANES), in_map),   # pred ids
                pl.BlockSpec((1, tile_rows, LANES), in_map),   # gold ids
            ],
            out_specs=pl.BlockSpec((1, 1, 4, LANES), lambda s, b, t: (s, b, 0, 0)),
        ),
        compiler_params=pltpu.CompilerParams(
            dimension_semantics=("parallel", "parallel", "arbitrary")),
        cost_estimate=cost,
    )(pred3, true3)

    # Tiny epilogue: per-batch combine  mean(exp(-10*gold) * pred^2)  per category.
    sums = jnp.sum(lane_sums, axis=(0, 3))            # (B, 4) sums of get_binary_value
    s_true = jnp.float32(S)
    total = jnp.float32(0.0)
    for c in range(2):
        gold = s_true - sums[:, 2 * c + 0]            # sum(1 - gbv(true_ids))
        pred = s_true - sums[:, 2 * c + 1]            # sum(1 - gbv(round_and_bound(pred)))
        total = total + jnp.mean(jnp.exp(-10.0 * gold) * pred * pred)
    return total * jnp.float32(PREF_PENALTY)


def _round_and_bound_ref(x):
    r = jnp.round(x)
    return r * jax.nn.sigmoid(50.0 * (222.5 - r))


def reference_loss(y_pred, y, data, *, veg_col=VEGETARIAN_COL, vegan_col=VEGAN_COL):
    """Pure-JAX reference mirroring the PyTorch forward."""
    pred_ids = y_pred[..., 0].astype(jnp.float32)
    true_ids = y[..., 0].astype(jnp.float32)
    idx = jnp.arange(data.shape[0], dtype=jnp.float32)
    total = jnp.float32(0.0)
    for col in (veg_col, vegan_col):
        v = data[:, col].astype(jnp.float32)
        centers = idx * v

        def gbv(x):
            return jnp.sum(v * jnp.exp(-(x[..., None] - centers) ** 2 / 0.01), axis=-1)

        gold = jnp.sum(1.0 - gbv(true_ids), axis=(1, 2, 3))
        pred = jnp.sum(1.0 - gbv(_round_and_bound_ref(pred_ids)), axis=(1, 2, 3))
        total = total + jnp.mean(jnp.exp(-10.0 * gold) * pred ** 2)
    return total * PREF_PENALTY


if __name__ == "__main__":
    key = jax.random.PRNGKey(0)
    k_data, k_pred, k_true, k_pred1, k_true1 = jax.random.split(key, 5)

    # Foods table: 5 nutrition columns + vegetarian + vegan flags.
    nutrition = jax.random.uniform(
        k_data, (N_FOODS, N_NUTRITION_COLS), jnp.float32, minval=0.1, maxval=2.0)
    veg_flag = (jnp.arange(N_FOODS) < 12).astype(jnp.float32)    # foods 0..11 vegetarian
    vegan_flag = (jnp.arange(N_FOODS) < 8).astype(jnp.float32)   # foods 0..7  vegan
    data = jnp.concatenate(
        [nutrition, veg_flag[:, None], vegan_flag[:, None]], axis=1)  # (16, 7)

    # y_pred / y are (B, D1, D2, D3, F); ids live in feature 0.
    B, D1, D2, D3, F = 2, 4, 16, 16, 2
    y_pred = jax.random.uniform(
        k_pred, (B, D1, D2, D3, F), jnp.float32, minval=0.0, maxval=float(N_FOODS))
    true_ids = jax.random.randint(k_true, (B, D1, D2, D3), 0, 8).astype(jnp.float32)
    y = jnp.stack([true_ids, jnp.zeros_like(true_ids)], axis=-1)

    ref = jax.block_until_ready(reference_loss(y_pred, y, data))

    loss = jax.block_until_ready(preference_loss(y_pred, y, data))
    assert jnp.isfinite(loss), loss
    assert jnp.allclose(loss, ref, rtol=1e-3, atol=1e-4), (loss, ref)

    # Optional exact-integer-match fast path (equality compare instead of exp).
    loss_exact = jax.block_until_ready(
        preference_loss(y_pred, y, data, exact_integer_ids=True))
    assert jnp.allclose(loss_exact, ref, rtol=1e-3, atol=1e-4), (loss_exact, ref)

    # B == 1 case exercises the megacore spatial split (n_par = 2) path.
    y_pred1 = jax.random.uniform(
        k_pred1, (1, 16, 16, 16, F), jnp.float32, minval=0.0, maxval=float(N_FOODS))
    true_ids1 = jax.random.randint(k_true1, (1, 16, 16, 16), 0, 8).astype(jnp.float32)
    y1 = jnp.stack([true_ids1, jnp.zeros_like(true_ids1)], axis=-1)
    ref1 = jax.block_until_ready(reference_loss(y_pred1, y1, data))
    loss1 = jax.block_until_ready(preference_loss(y_pred1, y1, data))
    assert jnp.allclose(loss1, ref1, rtol=1e-3, atol=1e-4), (loss1, ref1)

    print("KERNEL_OK")
</pallas_src>

<mosaic_0001>
module attributes {stable_mosaic.version = 11 : i64} {
  func.func @_preference_kernel(%arg0: i32, %arg1: i32, %arg2: i32, %arg3: memref<1x8x128xf32, #tpu.memory_space<vmem>>, %arg4: memref<1x8x128xf32, #tpu.memory_space<vmem>>, %arg5: memref<1x1x4x128xf32, #tpu.memory_space<vmem>>) attributes {dimension_semantics = [#tpu.dimension_semantics<parallel>, #tpu.dimension_semantics<parallel>, #tpu.dimension_semantics<arbitrary>], iteration_bounds = array<i64: 1, 2, 1>, scalar_prefetch = 0 : i64, scratch_operands = 0 : i64, tpu.core_type = #tpu.core_type<tc>, window_params = [{transform_indices = @transform_0, window_bounds = array<i64: 1, 8, 128>}, {transform_indices = @transform_1, window_bounds = array<i64: 1, 8, 128>}, {transform_indices = @transform_2, window_bounds = array<i64: 1, 1, 4, 128>}]} {
    %c0_i32 = arith.constant 0 : i32
    %0 = arith.cmpi eq, %arg2, %c0_i32 : i32
    %1 = arith.extui %0 : i1 to i32
    %c0_i32_0 = arith.constant 0 : i32
    %2 = arith.cmpi ne, %1, %c0_i32_0 : i32
    scf.if %2 {
      %cst_128 = arith.constant 0.000000e+00 : f32
      %338 = vector.broadcast %cst_128 : f32 to vector<1x1x4x128xf32>
      %c0_129 = arith.constant 0 : index
      %c0_130 = arith.constant 0 : index
      %c0_131 = arith.constant 0 : index
      %c0_132 = arith.constant 0 : index
      %339 = vector.load %arg5[%c0_129, %c0_130, %c0_131, %c0_132] : memref<1x1x4x128xf32, #tpu.memory_space<vmem>>, vector<1x1x4x128xf32>
      tpu.vector_store %arg5[%c0_129, %c0_130, %c0_131, %c0_132], %338 {strides = array<i32>} : memref<1x1x4x128xf32, #tpu.memory_space<vmem>>, vector<1x1x4x128xf32>,
    } else {
    }
    %c0 = arith.constant 0 : index
    %c0_1 = arith.constant 0 : index
    %c0_2 = arith.constant 0 : index
    %3 = vector.load %arg3[%c0, %c0_1, %c0_2] : memref<1x8x128xf32, #tpu.memory_space<vmem>>, vector<1x8x128xf32>
    %4 = vector.shape_cast %3 : vector<1x8x128xf32> to vector<8x128xf32>
    %c0_3 = arith.constant 0 : index
    %c0_4 = arith.constant 0 : index
    %c0_5 = arith.constant 0 : index
    %5 = vector.load %arg4[%c0_3, %c0_4, %c0_5] : memref<1x8x128xf32, #tpu.memory_space<vmem>>, vector<1x8x128xf32>
    %6 = vector.shape_cast %5 : vector<1x8x128xf32> to vector<8x128xf32>
    %7 = math.roundeven %4 : vector<8x128xf32>
    %cst = arith.constant 2.225000e+02 : f32
    %8 = vector.broadcast %cst : f32 to vector<8x128xf32>
    %9 = arith.subf %8, %7 : vector<8x128xf32>
    %cst_6 = arith.constant 5.000000e+01 : f32
    %10 = vector.broadcast %cst_6 : f32 to vector<8x128xf32>
    %11 = arith.mulf %10, %9 : vector<8x128xf32>
    %cst_7 = arith.constant 0.000000e+00 : f32
    %12 = vector.broadcast %cst_7 : f32 to vector<8x128xf32>
    %13 = arith.subf %12, %11 : vector<8x128xf32>
    %14 = math.exp %13 : vector<8x128xf32>
    %cst_8 = arith.constant 1.000000e+00 : f32
    %15 = vector.broadcast %cst_8 : f32 to vector<8x128xf32>
    %16 = arith.addf %15, %14 : vector<8x128xf32>
    %17 = arith.divf %7, %16 : vector<8x128xf32>
    %cst_9 = arith.constant 1.000000e+01 : f32
    %18 = vector.broadcast %cst_9 : f32 to vector<8x128xf32>
    %19 = arith.mulf %17, %18 : vector<8x128xf32>
    %cst_10 = arith.constant 1.000000e+01 : f32
    %20 = vector.broadcast %cst_10 : f32 to vector<8x128xf32>
    %21 = arith.mulf %6, %20 : vector<8x128xf32>
    %cst_11 = arith.constant 0.000000e+00 : f32
    %22 = vector.broadcast %cst_11 : f32 to vector<8x128xf32>
    %cst_12 = arith.constant 0.000000e+00 : f32
    %23 = vector.broadcast %cst_12 : f32 to vector<8x128xf32>
    %cst_13 = arith.constant 0.000000e+00 : f32
    %24 = vector.broadcast %cst_13 : f32 to vector<8x128xf32>
    %25 = arith.subf %21, %24 : vector<8x128xf32>
    %cst_14 = arith.constant 0.000000e+00 : f32
    %26 = vector.broadcast %cst_14 : f32 to vector<8x128xf32>
    %27 = arith.subf %19, %26 : vector<8x128xf32>
    %28 = arith.mulf %25, %25 : vector<8x128xf32>
    %cst_15 = arith.constant 0.000000e+00 : f32
    %29 = vector.broadcast %cst_15 : f32 to vector<8x128xf32>
    %30 = arith.subf %29, %28 : vector<8x128xf32>
    %31 = math.exp %30 : vector<8x128xf32>
    %32 = arith.mulf %27, %27 : vector<8x128xf32>
    %cst_16 = arith.constant 0.000000e+00 : f32
    %33 = vector.broadcast %cst_16 : f32 to vector<8x128xf32>
    %34 = arith.subf %33, %32 : vector<8x128xf32>
    %35 = math.exp %34 : vector<8x128xf32>
    %36 = arith.addf %22, %31 : vector<8x128xf32>
    %37 = arith.addf %23, %35 : vector<8x128xf32>
    %cst_17 = arith.constant 1.000000e+01 : f32
    %38 = vector.broadcast %cst_17 : f32 to vector<8x128xf32>
    %39 = arith.subf %21, %38 : vector<8x128xf32>
    %cst_18 = arith.constant 1.000000e+01 : f32
    %40 = vector.broadcast %cst_18 : f32 to vector<8x128xf32>
    %41 = arith.subf %19, %40 : vector<8x128xf32>
    %42 = arith.mulf %39, %39 : vector<8x128xf32>
    %cst_19 = arith.constant 0.000000e+00 : f32
    %43 = vector.broadcast %cst_19 : f32 to vector<8x128xf32>
    %44 = arith.subf %43, %42 : vector<8x128xf32>
    %45 = math.exp %44 : vector<8x128xf32>
    %46 = arith.mulf %41, %41 : vector<8x128xf32>
    %cst_20 = arith.constant 0.000000e+00 : f32
    %47 = vector.broadcast %cst_20 : f32 to vector<8x128xf32>
    %48 = arith.subf %47, %46 : vector<8x128xf32>
    %49 = math.exp %48 : vector<8x128xf32>
    %50 = arith.addf %36, %45 : vector<8x128xf32>
    %51 = arith.addf %37, %49 : vector<8x128xf32>
    %cst_21 = arith.constant 2.000000e+01 : f32
    %52 = vector.broadcast %cst_21 : f32 to vector<8x128xf32>
    %53 = arith.subf %21, %52 : vector<8x128xf32>
    %cst_22 = arith.constant 2.000000e+01 : f32
    %54 = vector.broadcast %cst_22 : f32 to vector<8x128xf32>
    %55 = arith.subf %19, %54 : vector<8x128xf32>
    %56 = arith.mulf %53, %53 : vector<8x128xf32>
    %cst_23 = arith.constant 0.000000e+00 : f32
    %57 = vector.broadcast %cst_23 : f32 to vector<8x128xf32>
    %58 = arith.subf %57, %56 : vector<8x128xf32>
    %59 = math.exp %58 : vector<8x128xf32>
    %60 = arith.mulf %55, %55 : vector<8x128xf32>
    %cst_24 = arith.constant 0.000000e+00 : f32
    %61 = vector.broadcast %cst_24 : f32 to vector<8x128xf32>
    %62 = arith.subf %61, %60 : vector<8x128xf32>
    %63 = math.exp %62 : vector<8x128xf32>
    %64 = arith.addf %50, %59 : vector<8x128xf32>
    %65 = arith.addf %51, %63 : vector<8x128xf32>
    %cst_25 = arith.constant 3.000000e+01 : f32
    %66 = vector.broadcast %cst_25 : f32 to vector<8x128xf32>
    %67 = arith.subf %21, %66 : vector<8x128xf32>
    %cst_26 = arith.constant 3.000000e+01 : f32
    %68 = vector.broadcast %cst_26 : f32 to vector<8x128xf32>
    %69 = arith.subf %19, %68 : vector<8x128xf32>
    %70 = arith.mulf %67, %67 : vector<8x128xf32>
    %cst_27 = arith.constant 0.000000e+00 : f32
    %71 = vector.broadcast %cst_27 : f32 to vector<8x128xf32>
    %72 = arith.subf %71, %70 : vector<8x128xf32>
    %73 = math.exp %72 : vector<8x128xf32>
    %74 = arith.mulf %69, %69 : vector<8x128xf32>
    %cst_28 = arith.constant 0.000000e+00 : f32
    %75 = vector.broadcast %cst_28 : f32 to vector<8x128xf32>
    %76 = arith.subf %75, %74 : vector<8x128xf32>
    %77 = math.exp %76 : vector<8x128xf32>
    %78 = arith.addf %64, %73 : vector<8x128xf32>
    %79 = arith.addf %65, %77 : vector<8x128xf32>
    %cst_29 = arith.constant 4.000000e+01 : f32
    %80 = vector.broadcast %cst_29 : f32 to vector<8x128xf32>
    %81 = arith.subf %21, %80 : vector<8x128xf32>
    %cst_30 = arith.constant 4.000000e+01 : f32
    %82 = vector.broadcast %cst_30 : f32 to vector<8x128xf32>
    %83 = arith.subf %19, %82 : vector<8x128xf32>
    %84 = arith.mulf %81, %81 : vector<8x128xf32>
    %cst_31 = arith.constant 0.000000e+00 : f32
    %85 = vector.broadcast %cst_31 : f32 to vector<8x128xf32>
    %86 = arith.subf %85, %84 : vector<8x128xf32>
    %87 = math.exp %86 : vector<8x128xf32>
    %88 = arith.mulf %83, %83 : vector<8x128xf32>
    %cst_32 = arith.constant 0.000000e+00 : f32
    %89 = vector.broadcast %cst_32 : f32 to vector<8x128xf32>
    %90 = arith.subf %89, %88 : vector<8x128xf32>
    %91 = math.exp %90 : vector<8x128xf32>
    %92 = arith.addf %78, %87 : vector<8x128xf32>
    %93 = arith.addf %79, %91 : vector<8x128xf32>
    %cst_33 = arith.constant 5.000000e+01 : f32
    %94 = vector.broadcast %cst_33 : f32 to vector<8x128xf32>
    %95 = arith.subf %21, %94 : vector<8x128xf32>
    %cst_34 = arith.constant 5.000000e+01 : f32
    %96 = vector.broadcast %cst_34 : f32 to vector<8x128xf32>
    %97 = arith.subf %19, %96 : vector<8x128xf32>
    %98 = arith.mulf %95, %95 : vector<8x128xf32>
    %cst_35 = arith.constant 0.000000e+00 : f32
    %99 = vector.broadcast %cst_35 : f32 to vector<8x128xf32>
    %100 = arith.subf %99, %98 : vector<8x128xf32>
    %101 = math.exp %100 : vector<8x128xf32>
    %102 = arith.mulf %97, %97 : vector<8x128xf32>
    %cst_36 = arith.constant 0.000000e+00 : f32
    %103 = vector.broadcast %cst_36 : f32 to vector<8x128xf32>
    %104 = arith.subf %103, %102 : vector<8x128xf32>
    %105 = math.exp %104 : vector<8x128xf32>
    %106 = arith.addf %92, %101 : vector<8x128xf32>
    %107 = arith.addf %93, %105 : vector<8x128xf32>
    %cst_37 = arith.constant 6.000000e+01 : f32
    %108 = vector.broadcast %cst_37 : f32 to vector<8x128xf32>
    %109 = arith.subf %21, %108 : vector<8x128xf32>
    %cst_38 = arith.constant 6.000000e+01 : f32
    %110 = vector.broadcast %cst_38 : f32 to vector<8x128xf32>
    %111 = arith.subf %19, %110 : vector<8x128xf32>
    %112 = arith.mulf %109, %109 : vector<8x128xf32>
    %cst_39 = arith.constant 0.000000e+00 : f32
    %113 = vector.broadcast %cst_39 : f32 to vector<8x128xf32>
    %114 = arith.subf %113, %112 : vector<8x128xf32>
    %115 = math.exp %114 : vector<8x128xf32>
    %116 = arith.mulf %111, %111 : vector<8x128xf32>
    %cst_40 = arith.constant 0.000000e+00 : f32
    %117 = vector.broadcast %cst_40 : f32 to vector<8x128xf32>
    %118 = arith.subf %117, %116 : vector<8x128xf32>
    %119 = math.exp %118 : vector<8x128xf32>
    %120 = arith.addf %106, %115 : vector<8x128xf32>
    %121 = arith.addf %107, %119 : vector<8x128xf32>
    %cst_41 = arith.constant 7.000000e+01 : f32
    %122 = vector.broadcast %cst_41 : f32 to vector<8x128xf32>
    %123 = arith.subf %21, %122 : vector<8x128xf32>
    %cst_42 = arith.constant 7.000000e+01 : f32
    %124 = vector.broadcast %cst_42 : f32 to vector<8x128xf32>
    %125 = arith.subf %19, %124 : vector<8x128xf32>
    %126 = arith.mulf %123, %123 : vector<8x128xf32>
    %cst_43 = arith.constant 0.000000e+00 : f32
    %127 = vector.broadcast %cst_43 : f32 to vector<8x128xf32>
    %128 = arith.subf %127, %126 : vector<8x128xf32>
    %129 = math.exp %128 : vector<8x128xf32>
    %130 = arith.mulf %125, %125 : vector<8x128xf32>
    %cst_44 = arith.constant 0.000000e+00 : f32
    %131 = vector.broadcast %cst_44 : f32 to vector<8x128xf32>
    %132 = arith.subf %131, %130 : vector<8x128xf32>
    %133 = math.exp %132 : vector<8x128xf32>
    %134 = arith.addf %120, %129 : vector<8x128xf32>
    %135 = arith.addf %121, %133 : vector<8x128xf32>
    %cst_45 = arith.constant 8.000000e+01 : f32
    %136 = vector.broadcast %cst_45 : f32 to vector<8x128xf32>
    %137 = arith.subf %21, %136 : vector<8x128xf32>
    %cst_46 = arith.constant 8.000000e+01 : f32
    %138 = vector.broadcast %cst_46 : f32 to vector<8x128xf32>
    %139 = arith.subf %19, %138 : vector<8x128xf32>
    %140 = arith.mulf %137, %137 : vector<8x128xf32>
    %cst_47 = arith.constant 0.000000e+00 : f32
    %141 = vector.broadcast %cst_47 : f32 to vector<8x128xf32>
    %142 = arith.subf %141, %140 : vector<8x128xf32>
    %143 = math.exp %142 : vector<8x128xf32>
    %144 = arith.mulf %139, %139 : vector<8x128xf32>
    %cst_48 = arith.constant 0.000000e+00 : f32
    %145 = vector.broadcast %cst_48 : f32 to vector<8x128xf32>
    %146 = arith.subf %145, %144 : vector<8x128xf32>
    %147 = math.exp %146 : vector<8x128xf32>
    %148 = arith.addf %134, %143 : vector<8x128xf32>
    %149 = arith.addf %135, %147 : vector<8x128xf32>
    %cst_49 = arith.constant 9.000000e+01 : f32
    %150 = vector.broadcast %cst_49 : f32 to vector<8x128xf32>
    %151 = arith.subf %21, %150 : vector<8x128xf32>
    %cst_50 = arith.constant 9.000000e+01 : f32
    %152 = vector.broadcast %cst_50 : f32 to vector<8x128xf32>
    %153 = arith.subf %19, %152 : vector<8x128xf32>
    %154 = arith.mulf %151, %151 : vector<8x128xf32>
    %cst_51 = arith.constant 0.000000e+00 : f32
    %155 = vector.broadcast %cst_51 : f32 to vector<8x128xf32>
    %156 = arith.subf %155, %154 : vector<8x128xf32>
    %157 = math.exp %156 : vector<8x128xf32>
    %158 = arith.mulf %153, %153 : vector<8x128xf32>
    %cst_52 = arith.constant 0.000000e+00 : f32
    %159 = vector.broadcast %cst_52 : f32 to vector<8x128xf32>
    %160 = arith.subf %159, %158 : vector<8x128xf32>
    %161 = math.exp %160 : vector<8x128xf32>
    %162 = arith.addf %148, %157 : vector<8x128xf32>
    %163 = arith.addf %149, %161 : vector<8x128xf32>
    %cst_53 = arith.constant 1.000000e+02 : f32
    %164 = vector.broadcast %cst_53 : f32 to vector<8x128xf32>
    %165 = arith.subf %21, %164 : vector<8x128xf32>
    %cst_54 = arith.constant 1.000000e+02 : f32
    %166 = vector.broadcast %cst_54 : f32 to vector<8x128xf32>
    %167 = arith.subf %19, %166 : vector<8x128xf32>
    %168 = arith.mulf %165, %165 : vector<8x128xf32>
    %cst_55 = arith.constant 0.000000e+00 : f32
    %169 = vector.broadcast %cst_55 : f32 to vector<8x128xf32>
    %170 = arith.subf %169, %168 : vector<8x128xf32>
    %171 = math.exp %170 : vector<8x128xf32>
    %172 = arith.mulf %167, %167 : vector<8x128xf32>
    %cst_56 = arith.constant 0.000000e+00 : f32
    %173 = vector.broadcast %cst_56 : f32 to vector<8x128xf32>
    %174 = arith.subf %173, %172 : vector<8x128xf32>
    %175 = math.exp %174 : vector<8x128xf32>
    %176 = arith.addf %162, %171 : vector<8x128xf32>
    %177 = arith.addf %163, %175 : vector<8x128xf32>
    %cst_57 = arith.constant 1.100000e+02 : f32
    %178 = vector.broadcast %cst_57 : f32 to vector<8x128xf32>
    %179 = arith.subf %21, %178 : vector<8x128xf32>
    %cst_58 = arith.constant 1.100000e+02 : f32
    %180 = vector.broadcast %cst_58 : f32 to vector<8x128xf32>
    %181 = arith.subf %19, %180 : vector<8x128xf32>
    %182 = arith.mulf %179, %179 : vector<8x128xf32>
    %cst_59 = arith.constant 0.000000e+00 : f32
    %183 = vector.broadcast %cst_59 : f32 to vector<8x128xf32>
    %184 = arith.subf %183, %182 : vector<8x128xf32>
    %185 = math.exp %184 : vector<8x128xf32>
    %186 = arith.mulf %181, %181 : vector<8x128xf32>
    %cst_60 = arith.constant 0.000000e+00 : f32
    %187 = vector.broadcast %cst_60 : f32 to vector<8x128xf32>
    %188 = arith.subf %187, %186 : vector<8x128xf32>
    %189 = math.exp %188 : vector<8x128xf32>
    %190 = arith.addf %176, %185 : vector<8x128xf32>
    %191 = arith.addf %177, %189 : vector<8x128xf32>
    %c0_61 = arith.constant 0 : index
    %c0_62 = arith.constant 0 : index
    %c0_63 = arith.constant 0 : index
    %c0_64 = arith.constant 0 : index
    %192 = vector.load %arg5[%c0_61, %c0_62, %c0_63, %c0_64] : memref<1x1x4x128xf32, #tpu.memory_space<vmem>>, vector<1x1x1x128xf32>
    %193 = vector.shape_cast %192 : vector<1x1x1x128xf32> to vector<1x128xf32>
    %cst_65 = arith.constant dense<0.000000e+00> : vector<128xf32>
    %194 = vector.multi_reduction <add>, %190, %cst_65 [0] : vector<8x128xf32> to vector<128xf32>
    %195 = vector.shape_cast %194 : vector<128xf32> to vector<1x128xf32>
    %196 = arith.addf %193, %195 : vector<1x128xf32>
    %c0_66 = arith.constant 0 : index
    %c0_67 = arith.constant 0 : index
    %c0_68 = arith.constant 0 : index
    %c0_69 = arith.constant 0 : index
    %197 = vector.load %arg5[%c0_66, %c0_67, %c0_68, %c0_69] : memref<1x1x4x128xf32, #tpu.memory_space<vmem>>, vector<1x1x1x128xf32>
    %198 = vector.shape_cast %197 : vector<1x1x1x128xf32> to vector<1x128xf32>
    %199 = vector.shape_cast %196 : vector<1x128xf32> to vector<1x1x1x128xf32>
    tpu.vector_store %arg5[%c0_66, %c0_67, %c0_68, %c0_69], %199 {strides = array<i32>} : memref<1x1x4x128xf32, #tpu.memory_space<vmem>>, vector<1x1x1x128xf32>,
    %c0_70 = arith.constant 0 : index
    %c0_71 = arith.constant 0 : index
    %c1 = arith.constant 1 : index
    %c0_72 = arith.constant 0 : index
    %200 = vector.load %arg5[%c0_70, %c0_71, %c1, %c0_72] : memref<1x1x4x128xf32, #tpu.memory_space<vmem>>, vector<1x1x1x128xf32>
    %201 = vector.shape_cast %200 : vector<1x1x1x128xf32> to vector<1x128xf32>
    %cst_73 = arith.constant dense<0.000000e+00> : vector<128xf32>
    %202 = vector.multi_reduction <add>, %191, %cst_73 [0] : vector<8x128xf32> to vector<128xf32>
    %203 = vector.shape_cast %202 : vector<128xf32> to vector<1x128xf32>
    %204 = arith.addf %201, %203 : vector<1x128xf32>
    %c0_74 = arith.constant 0 : index
    %c0_75 = arith.constant 0 : index
    %c1_76 = arith.constant 1 : index
    %c0_77 = arith.constant 0 : index
    %205 = vector.load %arg5[%c0_74, %c0_75, %c1_76, %c0_77] : memref<1x1x4x128xf32, #tpu.memory_space<vmem>>, vector<1x1x1x128xf32>
    %206 = vector.shape_cast %205 : vector<1x1x1x128xf32> to vector<1x128xf32>
    %207 = vector.shape_cast %204 : vector<1x128xf32> to vector<1x1x1x128xf32>
    tpu.vector_store %arg5[%c0_74, %c0_75, %c1_76, %c0_77], %207 {strides = array<i32>} : memref<1x1x4x128xf32, #tpu.memory_space<vmem>>, vector<1x1x1x128xf32>,
    %cst_78 = arith.constant 0.000000e+00 : f32
    %208 = vector.broadcast %cst_78 : f32 to vector<8x128xf32>
    %cst_79 = arith.constant 0.000000e+00 : f32
    %209 = vector.broadcast %cst_79 : f32 to vector<8x128xf32>
    %cst_80 = arith.constant 0.000000e+00 : f32
    %210 = vector.broadcast %cst_80 : f32 to vector<8x128xf32>
    %211 = arith.subf %21, %210 : vector<8x128xf32>
    %cst_81 = arith.constant 0.000000e+00 : f32
    %212 = vector.broadcast %cst_81 : f32 to vector<8x128xf32>
    %213 = arith.subf %19, %212 : vector<8x128xf32>
    %214 = arith.mulf %211, %211 : vector<8x128xf32>
    %cst_82 = arith.constant 0.000000e+00 : f32
    %215 = vector.broadcast %cst_82 : f32 to vector<8x128xf32>
    %216 = arith.subf %215, %214 : vector<8x128xf32>
    %217 = math.exp %216 : vector<8x128xf32>
    %218 = arith.mulf %213, %213 : vector<8x128xf32>
    %cst_83 = arith.constant 0.000000e+00 : f32
    %219 = vector.broadcast %cst_83 : f32 to vector<8x128xf32>
    %220 = arith.subf %219, %218 : vector<8x128xf32>
    %221 = math.exp %220 : vector<8x128xf32>
    %222 = arith.addf %208, %217 : vector<8x128xf32>
    %223 = arith.addf %209, %221 : vector<8x128xf32>
    %cst_84 = arith.constant 1.000000e+01 : f32
    %224 = vector.broadcast %cst_84 : f32 to vector<8x128xf32>
    %225 = arith.subf %21, %224 : vector<8x128xf32>
    %cst_85 = arith.constant 1.000000e+01 : f32
    %226 = vector.broadcast %cst_85 : f32 to vector<8x128xf32>
    %227 = arith.subf %19, %226 : vector<8x128xf32>
    %228 = arith.mulf %225, %225 : vector<8x128xf32>
    %cst_86 = arith.constant 0.000000e+00 : f32
    %229 = vector.broadcast %cst_86 : f32 to vector<8x128xf32>
    %230 = arith.subf %229, %228 : vector<8x128xf32>
    %231 = math.exp %230 : vector<8x128xf32>
    %232 = arith.mulf %227, %227 : vector<8x128xf32>
    %cst_87 = arith.constant 0.000000e+00 : f32
    %233 = vector.broadcast %cst_87 : f32 to vector<8x128xf32>
    %234 = arith.subf %233, %232 : vector<8x128xf32>
    %235 = math.exp %234 : vector<8x128xf32>
    %236 = arith.addf %222, %231 : vector<8x128xf32>
    %237 = arith.addf %223, %235 : vector<8x128xf32>
    %cst_88 = arith.constant 2.000000e+01 : f32
    %238 = vector.broadcast %cst_88 : f32 to vector<8x128xf32>
    %239 = arith.subf %21, %238 : vector<8x128xf32>
    %cst_89 = arith.constant 2.000000e+01 : f32
    %240 = vector.broadcast %cst_89 : f32 to vector<8x128xf32>
    %241 = arith.subf %19, %240 : vector<8x128xf32>
    %242 = arith.mulf %239, %239 : vector<8x128xf32>
    %cst_90 = arith.constant 0.000000e+00 : f32
    %243 = vector.broadcast %cst_90 : f32 to vector<8x128xf32>
    %244 = arith.subf %243, %242 : vector<8x128xf32>
    %245 = math.exp %244 : vector<8x128xf32>
    %246 = arith.mulf %241, %241 : vector<8x128xf32>
    %cst_91 = arith.constant 0.000000e+00 : f32
    %247 = vector.broadcast %cst_91 : f32 to vector<8x128xf32>
    %248 = arith.subf %247, %246 : vector<8x128xf32>
    %249 = math.exp %248 : vector<8x128xf32>
    %250 = arith.addf %236, %245 : vector<8x128xf32>
    %251 = arith.addf %237, %249 : vector<8x128xf32>
    %cst_92 = arith.constant 3.000000e+01 : f32
    %252 = vector.broadcast %cst_92 : f32 to vector<8x128xf32>
    %253 = arith.subf %21, %252 : vector<8x128xf32>
    %cst_93 = arith.constant 3.000000e+01 : f32
    %254 = vector.broadcast %cst_93 : f32 to vector<8x128xf32>
    %255 = arith.subf %19, %254 : vector<8x128xf32>
    %256 = arith.mulf %253, %253 : vector<8x128xf32>
    %cst_94 = arith.constant 0.000000e+00 : f32
    %257 = vector.broadcast %cst_94 : f32 to vector<8x128xf32>
    %258 = arith.subf %257, %256 : vector<8x128xf32>
    %259 = math.exp %258 : vector<8x128xf32>
    %260 = arith.mulf %255, %255 : vector<8x128xf32>
    %cst_95 = arith.constant 0.000000e+00 : f32
    %261 = vector.broadcast %cst_95 : f32 to vector<8x128xf32>
    %262 = arith.subf %261, %260 : vector<8x128xf32>
    %263 = math.exp %262 : vector<8x128xf32>
    %264 = arith.addf %250, %259 : vector<8x128xf32>
    %265 = arith.addf %251, %263 : vector<8x128xf32>
    %cst_96 = arith.constant 4.000000e+01 : f32
    %266 = vector.broadcast %cst_96 : f32 to vector<8x128xf32>
    %267 = arith.subf %21, %266 : vector<8x128xf32>
    %cst_97 = arith.constant 4.000000e+01 : f32
    %268 = vector.broadcast %cst_97 : f32 to vector<8x128xf32>
    %269 = arith.subf %19, %268 : vector<8x128xf32>
    %270 = arith.mulf %267, %267 : vector<8x128xf32>
    %cst_98 = arith.constant 0.000000e+00 : f32
    %271 = vector.broadcast %cst_98 : f32 to vector<8x128xf32>
    %272 = arith.subf %271, %270 : vector<8x128xf32>
    %273 = math.exp %272 : vector<8x128xf32>
    %274 = arith.mulf %269, %269 : vector<8x128xf32>
    %cst_99 = arith.constant 0.000000e+00 : f32
    %275 = vector.broadcast %cst_99 : f32 to vector<8x128xf32>
    %276 = arith.subf %275, %274 : vector<8x128xf32>
    %277 = math.exp %276 : vector<8x128xf32>
    %278 = arith.addf %264, %273 : vector<8x128xf32>
    %279 = arith.addf %265, %277 : vector<8x128xf32>
    %cst_100 = arith.constant 5.000000e+01 : f32
    %280 = vector.broadcast %cst_100 : f32 to vector<8x128xf32>
    %281 = arith.subf %21, %280 : vector<8x128xf32>
    %cst_101 = arith.constant 5.000000e+01 : f32
    %282 = vector.broadcast %cst_101 : f32 to vector<8x128xf32>
    %283 = arith.subf %19, %282 : vector<8x128xf32>
    %284 = arith.mulf %281, %281 : vector<8x128xf32>
    %cst_102 = arith.constant 0.000000e+00 : f32
    %285 = vector.broadcast %cst_102 : f32 to vector<8x128xf32>
    %286 = arith.subf %285, %284 : vector<8x128xf32>
    %287 = math.exp %286 : vector<8x128xf32>
    %288 = arith.mulf %283, %283 : vector<8x128xf32>
    %cst_103 = arith.constant 0.000000e+00 : f32
    %289 = vector.broadcast %cst_103 : f32 to vector<8x128xf32>
    %290 = arith.subf %289, %288 : vector<8x128xf32>
    %291 = math.exp %290 : vector<8x128xf32>
    %292 = arith.addf %278, %287 : vector<8x128xf32>
    %293 = arith.addf %279, %291 : vector<8x128xf32>
    %cst_104 = arith.constant 6.000000e+01 : f32
    %294 = vector.broadcast %cst_104 : f32 to vector<8x128xf32>
    %295 = arith.subf %21, %294 : vector<8x128xf32>
    %cst_105 = arith.constant 6.000000e+01 : f32
    %296 = vector.broadcast %cst_105 : f32 to vector<8x128xf32>
    %297 = arith.subf %19, %296 : vector<8x128xf32>
    %298 = arith.mulf %295, %295 : vector<8x128xf32>
    %cst_106 = arith.constant 0.000000e+00 : f32
    %299 = vector.broadcast %cst_106 : f32 to vector<8x128xf32>
    %300 = arith.subf %299, %298 : vector<8x128xf32>
    %301 = math.exp %300 : vector<8x128xf32>
    %302 = arith.mulf %297, %297 : vector<8x128xf32>
    %cst_107 = arith.constant 0.000000e+00 : f32
    %303 = vector.broadcast %cst_107 : f32 to vector<8x128xf32>
    %304 = arith.subf %303, %302 : vector<8x128xf32>
    %305 = math.exp %304 : vector<8x128xf32>
    %306 = arith.addf %292, %301 : vector<8x128xf32>
    %307 = arith.addf %293, %305 : vector<8x128xf32>
    %cst_108 = arith.constant 7.000000e+01 : f32
    %308 = vector.broadcast %cst_108 : f32 to vector<8x128xf32>
    %309 = arith.subf %21, %308 : vector<8x128xf32>
    %cst_109 = arith.constant 7.000000e+01 : f32
    %310 = vector.broadcast %cst_109 : f32 to vector<8x128xf32>
    %311 = arith.subf %19, %310 : vector<8x128xf32>
    %312 = arith.mulf %309, %309 : vector<8x128xf32>
    %cst_110 = arith.constant 0.000000e+00 : f32
    %313 = vector.broadcast %cst_110 : f32 to vector<8x128xf32>
    %314 = arith.subf %313, %312 : vector<8x128xf32>
    %315 = math.exp %314 : vector<8x128xf32>
    %316 = arith.mulf %311, %311 : vector<8x128xf32>
    %cst_111 = arith.constant 0.000000e+00 : f32
    %317 = vector.broadcast %cst_111 : f32 to vector<8x128xf32>
    %318 = arith.subf %317, %316 : vector<8x128xf32>
    %319 = math.exp %318 : vector<8x128xf32>
    %320 = arith.addf %306, %315 : vector<8x128xf32>
    %321 = arith.addf %307, %319 : vector<8x128xf32>
    %c0_112 = arith.constant 0 : index
    %c0_113 = arith.constant 0 : index
    %c2 = arith.constant 2 : index
    %c0_114 = arith.constant 0 : index
    %322 = vector.load %arg5[%c0_112, %c0_113, %c2, %c0_114] : memref<1x1x4x128xf32, #tpu.memory_space<vmem>>, vector<1x1x1x128xf32>
    %323 = vector.shape_cast %322 : vector<1x1x1x128xf32> to vector<1x128xf32>
    %cst_115 = arith.constant dense<0.000000e+00> : vector<128xf32>
    %324 = vector.multi_reduction <add>, %320, %cst_115 [0] : vector<8x128xf32> to vector<128xf32>
    %325 = vector.shape_cast %324 : vector<128xf32> to vector<1x128xf32>
    %326 = arith.addf %323, %325 : vector<1x128xf32>
    %c0_116 = arith.constant 0 : index
    %c0_117 = arith.constant 0 : index
    %c2_118 = arith.constant 2 : index
    %c0_119 = arith.constant 0 : index
    %327 = vector.load %arg5[%c0_116, %c0_117, %c2_118, %c0_119] : memref<1x1x4x128xf32, #tpu.memory_space<vmem>>, vector<1x1x1x128xf32>
    %328 = vector.shape_cast %327 : vector<1x1x1x128xf32> to vector<1x128xf32>
    %329 = vector.shape_cast %326 : vector<1x128xf32> to vector<1x1x1x128xf32>
    tpu.vector_store %arg5[%c0_116, %c0_117, %c2_118, %c0_119], %329 {strides = array<i32>} : memref<1x1x4x128xf32, #tpu.memory_space<vmem>>, vector<1x1x1x128xf32>,
    %c0_120 = arith.constant 0 : index
    %c0_121 = arith.constant 0 : index
    %c3 = arith.constant 3 : index
    %c0_122 = arith.constant 0 : index
    %330 = vector.load %arg5[%c0_120, %c0_121, %c3, %c0_122] : memref<1x1x4x128xf32, #tpu.memory_space<vmem>>, vector<1x1x1x128xf32>
    %331 = vector.shape_cast %330 : vector<1x1x1x128xf32> to vector<1x128xf32>
    %cst_123 = arith.constant dense<0.000000e+00> : vector<128xf32>
    %332 = vector.multi_reduction <add>, %321, %cst_123 [0] : vector<8x128xf32> to vector<128xf32>
    %333 = vector.shape_cast %332 : vector<128xf32> to vector<1x128xf32>
    %334 = arith.addf %331, %333 : vector<1x128xf32>
    %c0_124 = arith.constant 0 : index
    %c0_125 = arith.constant 0 : index
    %c3_126 = arith.constant 3 : index
    %c0_127 = arith.constant 0 : index
    %335 = vector.load %arg5[%c0_124, %c0_125, %c3_126, %c0_127] : memref<1x1x4x128xf32, #tpu.memory_space<vmem>>, vector<1x1x1x128xf32>
    %336 = vector.shape_cast %335 : vector<1x1x1x128xf32> to vector<1x128xf32>
    %337 = vector.shape_cast %334 : vector<1x128xf32> to vector<1x1x1x128xf32>
    tpu.vector_store %arg5[%c0_124, %c0_125, %c3_126, %c0_127], %337 {strides = array<i32>} : memref<1x1x4x128xf32, #tpu.memory_space<vmem>>, vector<1x1x1x128xf32>,
    return
  }
  func.func @transform_0(%arg0: i32, %arg1: i32, %arg2: i32) -> (i32, i32, i32) {
    %c1_i32 = arith.constant 1 : i32
    %0 = arith.muli %arg0, %c1_i32 : i32
    %1 = arith.addi %0, %arg2 : i32
    %c0_i32 = arith.constant 0 : i32
    %c0_i32_0 = arith.constant 0 : i32
    return %arg1, %1, %c0_i32 : i32, i32, i32
  }
  func.func @transform_1(%arg0: i32, %arg1: i32, %arg2: i32) -> (i32, i32, i32) {
    %c1_i32 = arith.constant 1 : i32
    %0 = arith.muli %arg0, %c1_i32 : i32
    %1 = arith.addi %0, %arg2 : i32
    %c0_i32 = arith.constant 0 : i32
    %c0_i32_0 = arith.constant 0 : i32
    return %arg1, %1, %c0_i32 : i32, i32, i32
  }
  func.func @transform_2(%arg0: i32, %arg1: i32, %arg2: i32) -> (i32, i32, i32, i32) {
    %c0_i32 = arith.constant 0 : i32
    %c0_i32_0 = arith.constant 0 : i32
    %c0_i32_1 = arith.constant 0 : i32
    return %arg0, %arg1, %c0_i32, %c0_i32_0 : i32, i32, i32, i32
  }
}

</mosaic_0001>

<llo_original>
// kernel: tpu_custom_call.1
$region0: #{tpu_custom_call.1}
  #allocation0 [shape = 'u32[]', space=smem, size = 0x4, offset = 0x4, fixed_abs, tag = 'smem constant byte address 0x4 - core index']
  #allocation1 [shape = 'u32[144,128]{1,0:T(1,128)}', space=vmem, size = 0x12000, scoped, tag = 'internal scratch']
  %s0 = inlined_call_operand.hbm [shape: f32[2,8,128], index: 0, kind: input, shape index: {}]
  %s1 = inlined_call_operand.hbm [shape: f32[2,8,128], index: 1, kind: input, shape index: {}]
  %s2 = inlined_call_operand.hbm [shape: f32[1,2,4,128], index: 2, kind: output, shape index: {}]
  %s3 = sld [smem:[#allocation0]]
  $region53: #{tpu_custom_call.1} parent=0
    _
  %s5 = ssub.s32 1, %s3
  %s6 = scalar_select 0, %s5, %s3
  $region1: #{tpu_custom_call.1} parent=0
    #allocation2 [shape = 'u8[8192]{0}', space=vmem, size = 0x2000, scoped, tag = 'input window, operand 0']
    #allocation3 [shape = 's32[2]{0}', space=sflag, size = 0x8, scoped, tag = 'scoped memory for tpu_custom_call.1']
    #allocation4 [shape = 's32[2]{0}', space=sflag, size = 0x8, scoped, tag = 'scoped memory for tpu_custom_call.1']
    #allocation5 [shape = 'u8[8192]{0}', space=vmem, size = 0x2000, scoped, tag = 'input window, operand 1']
    #allocation6 [shape = 's32[2]{0}', space=sflag, size = 0x8, scoped, tag = 'scoped memory for tpu_custom_call.1']
    #allocation7 [shape = 'u8[4096]{0}', space=vmem, size = 0x1000, scoped, tag = 'output window, operand 0']
    %7 = vsyncpa [#allocation3], 0
    %s8 = scalar_lea.sflag [#allocation3], 1
    %9 = vsyncpa %s8, 0
    %10 = vsyncpa [#allocation6], 0
    %s11 = scalar_lea.sflag [#allocation6], 1
    %12 = vsyncpa %s11, 0
    %13 = vsyncpa [#allocation4], 0
    %s14 = scalar_lea.sflag [#allocation4], 1
    %15 = vsyncpa %s14, 0
    loop: start=0, step=1, limit=4
    $region2: #{tpu_custom_call.1} parent=1 // loop_pre_header
      _
    $region3: #{tpu_custom_call.1} parent=1 // loop_header
      %s17 = sphi 0, %s21
      %p18 = scmp.ge.s32.totalorder %s17, 4
      %s24 = sphi 0, %s43
      %s25 = sphi 0, %s39
      %s26 = sphi 0, %s35
      %s27 = sphi 0, %s24
      %s28 = sphi 0, %s25
      %s29 = sphi 0, %s26
      %s30 = sphi 0, %s27
      %s31 = sphi 0, %s28
      %s32 = sphi 0, %s29
      %s50 = sphi 0, %s52
      %s53 = sphi 0, %s50
      %s54 = sphi 0, %s53
      %s70 = sphi 0, %s54
      %s80 = sphi 0, %s82
      %s83 = sphi 0, %s80
      %s84 = sphi 0, %s83
      %s100 = sphi 0, %s84
      %s108 = sphi 0, %s110
      %s111 = sphi 0, %s108
      %s112 = sphi 0, %s111
      %s128 = sphi 0, %s112
    $region4: #{tpu_custom_call.1} parent=1 // loop_header_branch
      %20 = sbr.rel (%p18) target = $region8
    $region5: #{tpu_custom_call.1} parent=1 // loop_body
      %s22 = ssub.s32 %s17, 1
      %s23 = ssub.s32 %s17, 2
      %s33 = sadd.s32 1, %s26
      %p34 = scmp.ge.s32.totalorder %s33, 1
      %s35 = scalar_select %p34, 0, %s33
      %s36 = sadd.s32 1, %s25
      %s37 = scalar_select %p34, %s36, %s25
      %p38 = scmp.ge.s32.totalorder %s37, 2
      %s39 = scalar_select %p38, 0, %s37
      %s40 = sadd.s32 1, %s24
      %s41 = scalar_select %p38, %s40, %s24
      %p42 = scmp.ge.s32.totalorder %s41, 1
      %s43 = scalar_select %p42, 0, %s41
      %s44 = sadd.s32 %s24, %s26
      %s45 = sadd.s32 %s43, %s35
      %s46 = ssub.s32 %s25, %s39
      %s47 = ssub.s32 %s44, %s45
      %s48 = sor.u32 %s46, %s47
      %p49 = scmp.eq.s32.totalorder %s48, 0
      %s51 = sadd.s32 %s50, 1
      %s52 = scalar_select %p49, %s50, %s51
      %p55 = pneg %p49
      %p56 = scmp.eq.s32.totalorder %s17, 1
      %p57 = por %p55, %p56
      %p58 = scmp.ne.s32.totalorder %s50, %s53
      %p59 = scmp.eq.s32.totalorder %s17, 0
      %p60 = por %p58, %p59
      %p61 = scmp.ne.s32.totalorder %s50, %s53
      %p62 = scmp.eq.s32.totalorder %s22, 1
      %p63 = por %p61, %p62
      %p64 = scmp.ne.s32.totalorder %s53, %s54
      %p65 = scmp.eq.s32.totalorder %s22, 0
      %p66 = por %p64, %p65
      %p67 = scmp.ne.s32.totalorder %s53, %s54
      %p68 = scmp.eq.s32.totalorder %s23, 1
      %p69 = por %p67, %p68
      %p71 = scmp.ne.s32.totalorder %s54, %s70
      %p72 = scmp.eq.s32.totalorder %s23, 0
      %p73 = por %p71, %p72
      %s74 = sadd.s32 %s24, %s26
      %s75 = sadd.s32 %s43, %s35
      %s76 = ssub.s32 %s25, %s39
      %s77 = ssub.s32 %s74, %s75
      %s78 = sor.u32 %s76, %s77
      %p79 = scmp.eq.s32.totalorder %s78, 0
      %s81 = sadd.s32 %s80, 1
      %s82 = scalar_select %p79, %s80, %s81
      %p85 = pneg %p79
      %p86 = scmp.eq.s32.totalorder %s17, 1
      %p87 = por %p85, %p86
      %p88 = scmp.ne.s32.totalorder %s80, %s83
      %p89 = scmp.eq.s32.totalorder %s17, 0
      %p90 = por %p88, %p89
      %p91 = scmp.ne.s32.totalorder %s80, %s83
      %p92 = scmp.eq.s32.totalorder %s22, 1
      %p93 = por %p91, %p92
      %p94 = scmp.ne.s32.totalorder %s83, %s84
      %p95 = scmp.eq.s32.totalorder %s22, 0
      %p96 = por %p94, %p95
      %p97 = scmp.ne.s32.totalorder %s83, %s84
      %p98 = scmp.eq.s32.totalorder %s23, 1
      %p99 = por %p97, %p98
      %p101 = scmp.ne.s32.totalorder %s84, %s100
      %p102 = scmp.eq.s32.totalorder %s23, 0
      %p103 = por %p101, %p102
      %s104 = ssub.s32 %s24, %s43
      %s105 = ssub.s32 %s25, %s39
      %s106 = sor.u32 %s104, %s105
      %p107 = scmp.eq.s32.totalorder %s106, 0
      %s109 = sadd.s32 %s108, 1
      %s110 = scalar_select %p107, %s108, %s109
      %p113 = pneg %p107
      %p114 = scmp.eq.s32.totalorder %s17, 1
      %p115 = por %p113, %p114
      %p116 = scmp.ne.s32.totalorder %s108, %s111
      %p117 = scmp.eq.s32.totalorder %s17, 0
      %p118 = por %p116, %p117
      %p119 = scmp.ne.s32.totalorder %s108, %s111
      %p120 = scmp.eq.s32.totalorder %s22, 1
      %p121 = por %p119, %p120
      %p122 = scmp.ne.s32.totalorder %s111, %s112
      %p123 = scmp.eq.s32.totalorder %s22, 0
      %p124 = por %p122, %p123
      %p125 = scmp.ne.s32.totalorder %s111, %s112
      %p126 = scmp.eq.s32.totalorder %s23, 1
      %p127 = por %p125, %p126
      %p129 = scmp.ne.s32.totalorder %s112, %s128
      %p130 = scmp.eq.s32.totalorder %s23, 0
      %p131 = por %p129, %p130
      %p132 = scmp.le.s32.totalorder 1, %s17
      %p133 = scmp.lt.s32.totalorder %s17, 3
      %p134 = pnand %p132, %p133
      %p135 = pneg %p134
      // Predicated region
      $region9: #{tpu_custom_call.1} parent=5 // pred_check
        _
      $region10: #{tpu_custom_call.1} parent=5 // pred_check_branch
        %137 = sbr.rel (%p134) target = $region12
      $region11: #{tpu_custom_call.1} parent=5 // pred_region
        %s138 = ssub.s32 %s17, 1
      $region12: #{tpu_custom_call.1} parent=5 // pred_fallthru
        _
      %p139 = scmp.lt.s32.totalorder %s17, 2
      // Predicated region
      $region13: #{tpu_custom_call.1} parent=5 // pred_check
        %p140 = pneg %p139
      $region14: #{tpu_custom_call.1} parent=5 // pred_check_branch
        %142 = sbr.rel (%p140) target = $region16
      $region15: #{tpu_custom_call.1} parent=5 // pred_region
        // Predicated region
        $region17: #{tpu_custom_call.1} parent=15 // pred_check
          %p143 = pneg %p60
        $region18: #{tpu_custom_call.1} parent=15 // pred_check_branch
          %145 = sbr.rel (%p143) target = $region20
        $region19: #{tpu_custom_call.1} parent=15 // pred_region
          %s146 = sand.u32 %s50, 1
          %s147 = scalar_lea.sflag [#allocation3], %s146
          %s148 = sand.u32 %s50, 1
          %s149 = smul.addr %s148, 8
          %s150 = scalar_lea.vmem [#allocation2], %s149
          %s151 = sadd.s32 %s24, %s26
          %s153 = ssub.s32 128, 128
          %154 = vsyncadd %s147, %s153
          %s155 = sadd.s32 %s151, %s25
          %s156 = smul.addr %s155, 128
          %s157 = scalar_lea.hbm %s0, %s156
          %s159 = sshll.u32 %s150, 4
          %s160 = int_to_ptr.vmem [resolvable:$true] %s159
          %162 = dma.hbm_to_vmem [thread:$0]  %s157, 128, %s160, %s147
        $region20: #{tpu_custom_call.1} parent=15 // pred_fallthru
          _
        // Predicated region
        $region21: #{tpu_custom_call.1} parent=15 // pred_check
          %p163 = pneg %p90
        $region22: #{tpu_custom_call.1} parent=15 // pred_check_branch
          %165 = sbr.rel (%p163) target = $region24
        $region23: #{tpu_custom_call.1} parent=15 // pred_region
          %s166 = sand.u32 %s80, 1
          %s167 = scalar_lea.sflag [#allocation6], %s166
          %s168 = sand.u32 %s80, 1
          %s169 = smul.addr %s168, 8
          %s170 = scalar_lea.vmem [#allocation5], %s169
          %s171 = sadd.s32 %s24, %s26
          %s173 = ssub.s32 128, 128
          %174 = vsyncadd %s167, %s173
          %s175 = sadd.s32 %s171, %s25
          %s176 = smul.addr %s175, 128
          %s177 = scalar_lea.hbm %s1, %s176
          %s179 = sshll.u32 %s170, 4
          %s180 = int_to_ptr.vmem [resolvable:$true] %s179
          %182 = dma.hbm_to_vmem [thread:$0]  %s177, 128, %s180, %s167
        $region24: #{tpu_custom_call.1} parent=15 // pred_fallthru
          _
      $region16: #{tpu_custom_call.1} parent=5 // pred_fallthru
        _
      %p183 = scmp.le.s32.totalorder 1, %s17
      %p184 = scmp.lt.s32.totalorder %s17, 3
      %p185 = pnand %p183, %p184
      %p186 = pneg %p185
      // Predicated region
      $region25: #{tpu_custom_call.1} parent=5 // pred_check
        _
      $region26: #{tpu_custom_call.1} parent=5 // pred_check_branch
        %188 = sbr.rel (%p185) target = $region28
      $region27: #{tpu_custom_call.1} parent=5 // pred_region
        %s189 = ssub.s32 %s17, 1
        %s190 = sand.u32 %s53, 1
        %s191 = scalar_lea.sflag [#allocation3], %s190
        %s192 = sand.u32 %s53, 1
        %s193 = smul.addr %s192, 8
        %s194 = scalar_lea.vmem [#allocation2], %s193
        // Predicated region
        $region29: #{tpu_custom_call.1} parent=27 // pred_check
          %p195 = pneg %p66
        $region30: #{tpu_custom_call.1} parent=27 // pred_check_branch
          %197 = sbr.rel (%p195) target = $region32
        $region31: #{tpu_custom_call.1} parent=27 // pred_region
          %198 = dma.done %s191, 128
        $region32: #{tpu_custom_call.1} parent=27 // pred_fallthru
          _
        %s199 = sand.u32 %s83, 1
        %s200 = scalar_lea.sflag [#allocation6], %s199
        %s201 = sand.u32 %s83, 1
        %s202 = smul.addr %s201, 8
        %s203 = scalar_lea.vmem [#allocation5], %s202
        // Predicated region
        $region33: #{tpu_custom_call.1} parent=27 // pred_check
          %p204 = pneg %p96
        $region34: #{tpu_custom_call.1} parent=27 // pred_check_branch
          %206 = sbr.rel (%p204) target = $region36
        $region35: #{tpu_custom_call.1} parent=27 // pred_region
          %207 = dma.done %s200, 128
        $region36: #{tpu_custom_call.1} parent=27 // pred_fallthru
          _
        %s208 = sand.u32 %s53, 1
        %s209 = scalar_lea.sflag [#allocation3], %s208
        %s210 = sand.u32 %s53, 1
        %s211 = smul.addr %s210, 8
        %s212 = scalar_lea.vmem [#allocation2], %s211
        %p213 = pneg %p66
        %p214 = pneg %p63
        %s215 = sand.u32 %s83, 1
        %s216 = scalar_lea.sflag [#allocation6], %s215
        %s217 = sand.u32 %s83, 1
        %s218 = smul.addr %s217, 8
        %s219 = scalar_lea.vmem [#allocation5], %s218
        %p220 = pneg %p96
        %p221 = pneg %p93
        %p222 = pneg %p124
        %p223 = pneg %p121
        %s224 = sand.u32 %s111, 1
        %s225 = scalar_lea.sflag [#allocation4], %s224
        %s226 = sand.u32 %s111, 1
        %s227 = smul.addr %s226, 4
        %s228 = scalar_lea.vmem [#allocation7], %s227
        %s229 = sadd.s32 %s27, %s29
        %s230 = sadd.s32 %s27, %s29
        %p231 = scmp.eq.s32.totalorder %s29, 0
        // Predicated region
        $region37: #{tpu_custom_call.1} parent=27 // pred_check
          %p232 = pneg %p231
        $region38: #{tpu_custom_call.1} parent=27 // pred_check_branch
          %234 = sbr.rel (%p232) target = $region40
        $region39: #{tpu_custom_call.1} parent=27 // pred_region
          %235 = vst [vmem:[%s228] sm:$0xf] 0.0
        $region40: #{tpu_custom_call.1} parent=27 // pred_fallthru
          _
        %v236 = vld [vmem:[%s194] sm:$0xff]
        %v237 = vld [vmem:[%s203] sm:$0xff]
        %v238 = vround.ne.pseudo %v236
        %v239 = vsub.f32 222.5, %v238
        %v240 = vmul.f32 %v239, 50.0
        %v241 = vsub.f32 0.0, %v240
        %v242 = vmul.f32 %v241, 1.442695
        %v243 = vpow.pop %v242
        %v244 = vadd.f32 %v243, 1.0
        %v245 = vrcp.pop %v244
        %v246 = vmul.f32 %v238, %v245
        %v247 = vmul.f32 %v246, 10.0
        %v248 = vmul.f32 %v237, 10.0
        %v249 = vmul.f32 %v248, %v248
        %v250 = vsub.f32 0.0, %v249
        %v251 = vmul.f32 %v250, 1.442695
        %v252 = vpow.pop %v251
        %v253 = vmul.f32 %v247, %v247
        %v254 = vsub.f32 0.0, %v253
        %v255 = vmul.f32 %v254, 1.442695
        %v256 = vpow.pop %v255
        %v257 = vadd.f32 %v252, 0.0
        %v258 = vadd.f32 %v256, 0.0
        %v259 = vsub.f32 %v248, 10.0
        %v260 = vsub.f32 %v247, 10.0
        %v261 = vmul.f32 %v259, %v259
        %v262 = vsub.f32 0.0, %v261
        %v263 = vmul.f32 %v262, 1.442695
        %v264 = vpow.pop %v263
        %v265 = vmul.f32 %v260, %v260
        %v266 = vsub.f32 0.0, %v265
        %v267 = vmul.f32 %v266, 1.442695
        %v268 = vpow.pop %v267
        %v269 = vadd.f32 %v257, %v264
        %v270 = vadd.f32 %v258, %v268
        %v271 = vsub.f32 %v248, 20.0
        %v272 = vsub.f32 %v247, 20.0
        %v273 = vmul.f32 %v271, %v271
        %v274 = vsub.f32 0.0, %v273
        %v275 = vmul.f32 %v274, 1.442695
        %v276 = vpow.pop %v275
        %v277 = vmul.f32 %v272, %v272
        %v278 = vsub.f32 0.0, %v277
        %v279 = vmul.f32 %v278, 1.442695
        %v280 = vpow.pop %v279
        %v281 = vadd.f32 %v269, %v276
        %v282 = vadd.f32 %v270, %v280
        %v283 = vsub.f32 %v248, 30.0
        %v284 = vsub.f32 %v247, 30.0
        %v285 = vmul.f32 %v283, %v283
        %v286 = vsub.f32 0.0, %v285
        %v287 = vmul.f32 %v286, 1.442695
        %v288 = vpow.pop %v287
        %v289 = vmul.f32 %v284, %v284
        %v290 = vsub.f32 0.0, %v289
        %v291 = vmul.f32 %v290, 1.442695
        %v292 = vpow.pop %v291
        %v293 = vadd.f32 %v281, %v288
        %v294 = vadd.f32 %v282, %v292
        %v295 = vsub.f32 %v248, 40.0
        %v296 = vsub.f32 %v247, 40.0
        %v297 = vmul.f32 %v295, %v295
        %v298 = vsub.f32 0.0, %v297
        %v299 = vmul.f32 %v298, 1.442695
        %v300 = vpow.pop %v299
        %v301 = vmul.f32 %v296, %v296
        %v302 = vsub.f32 0.0, %v301
        %v303 = vmul.f32 %v302, 1.442695
        %v304 = vpow.pop %v303
        %v305 = vadd.f32 %v293, %v300
        %v306 = vadd.f32 %v294, %v304
        %v307 = vsub.f32 %v248, 50.0
        %v308 = vsub.f32 %v247, 50.0
        %v309 = vmul.f32 %v307, %v307
        %v310 = vsub.f32 0.0, %v309
        %v311 = vmul.f32 %v310, 1.442695
        %v312 = vpow.pop %v311
        %v313 = vmul.f32 %v308, %v308
        %v314 = vsub.f32 0.0, %v313
        %v315 = vmul.f32 %v314, 1.442695
        %v316 = vpow.pop %v315
        %v317 = vadd.f32 %v305, %v312
        %v318 = vadd.f32 %v306, %v316
        %v319 = vsub.f32 %v248, 60.0
        %v320 = vsub.f32 %v247, 60.0
        %v321 = vmul.f32 %v319, %v319
        %v322 = vsub.f32 0.0, %v321
        %v323 = vmul.f32 %v322, 1.442695
        %v324 = vpow.pop %v323
        %v325 = vmul.f32 %v320, %v320
        %v326 = vsub.f32 0.0, %v325
        %v327 = vmul.f32 %v326, 1.442695
        %v328 = vpow.pop %v327
        %v329 = vadd.f32 %v317, %v324
        %v330 = vadd.f32 %v318, %v328
        %v331 = vsub.f32 %v248, 70.0
        %v332 = vsub.f32 %v247, 70.0
        %v333 = vmul.f32 %v331, %v331
        %v334 = vsub.f32 0.0, %v333
        %v335 = vmul.f32 %v334, 1.442695
        %v336 = vpow.pop %v335
        %v337 = vmul.f32 %v332, %v332
        %v338 = vsub.f32 0.0, %v337
        %v339 = vmul.f32 %v338, 1.442695
        %v340 = vpow.pop %v339
        %v341 = vadd.f32 %v329, %v336
        %v342 = vadd.f32 %v330, %v340
        %v343 = vsub.f32 %v248, 80.0
        %v344 = vsub.f32 %v247, 80.0
        %v345 = vmul.f32 %v343, %v343
        %v346 = vsub.f32 0.0, %v345
        %v347 = vmul.f32 %v346, 1.442695
        %v348 = vpow.pop %v347
        %v349 = vmul.f32 %v344, %v344
        %v350 = vsub.f32 0.0, %v349
        %v351 = vmul.f32 %v350, 1.442695
        %v352 = vpow.pop %v351
        %v353 = vadd.f32 %v341, %v348
        %v354 = vadd.f32 %v342, %v352
        %v355 = vsub.f32 %v248, 90.0
        %v356 = vsub.f32 %v247, 90.0
        %v357 = vmul.f32 %v355, %v355
        %v358 = vsub.f32 0.0, %v357
        %v359 = vmul.f32 %v358, 1.442695
        %v360 = vpow.pop %v359
        %v361 = vmul.f32 %v356, %v356
        %v362 = vsub.f32 0.0, %v361
        %v363 = vmul.f32 %v362, 1.442695
        %v364 = vpow.pop %v363
        %v365 = vadd.f32 %v353, %v360
        %v366 = vadd.f32 %v354, %v364
        %v367 = vsub.f32 %v248, 100.0
        %v368 = vsub.f32 %v247, 100.0
        %v369 = vmul.f32 %v367, %v367
        %v370 = vsub.f32 0.0, %v369
        %v371 = vmul.f32 %v370, 1.442695
        %v372 = vpow.pop %v371
        %v373 = vmul.f32 %v368, %v368
        %v374 = vsub.f32 0.0, %v373
        %v375 = vmul.f32 %v374, 1.442695
        %v376 = vpow.pop %v375
        %v377 = vadd.f32 %v365, %v372
        %v378 = vadd.f32 %v366, %v376
        %v379 = vsub.f32 %v248, 110.0
        %v380 = vsub.f32 %v247, 110.0
        %v381 = vmul.f32 %v379, %v379
        %v382 = vsub.f32 0.0, %v381
        %v383 = vmul.f32 %v382, 1.442695
        %v384 = vpow.pop %v383
        %v385 = vmul.f32 %v380, %v380
        %v386 = vsub.f32 0.0, %v385
        %v387 = vmul.f32 %v386, 1.442695
        %v388 = vpow.pop %v387
        %v389 = vadd.f32 %v377, %v384
        %v390 = vadd.f32 %v378, %v388
        %v391 = vld [vmem:[%s228] sm:$0x1]
        %v392 = vrot.slane %v389, 4
        %v393 = vadd.f32 %v389, %v392
        %v394 = vrot.slane %v393, 2
        %v395 = vadd.f32 %v393, %v394
        %v396 = vrot.slane %v395, 1
        %v397 = vadd.f32 %v395, %v396
        %v398 = vadd.f32 %v391, %v397
        %399 = vst [vmem:[%s228] sm:$0x1] %v398
        %v400 = vld [vmem:[%s228 + $0x1] sm:$0x1]
        %v401 = vrot.slane %v390, 4
        %v402 = vadd.f32 %v390, %v401
        %v403 = vrot.slane %v402, 2
        %v404 = vadd.f32 %v402, %v403
        %v405 = vrot.slane %v404, 1
        %v406 = vadd.f32 %v404, %v405
        %v407 = vadd.f32 %v400, %v406
        %408 = vst [vmem:[%s228 + $0x1] sm:$0x1] %v407
        %v409 = vld [vmem:[%s228 + $0x2] sm:$0x1]
        %v410 = vrot.slane %v341, 4
        %v411 = vadd.f32 %v341, %v410
        %v412 = vrot.slane %v411, 2
        %v413 = vadd.f32 %v411, %v412
        %v414 = vrot.slane %v413, 1
        %v415 = vadd.f32 %v413, %v414
        %v416 = vadd.f32 %v409, %v415
        %417 = vst [vmem:[%s228 + $0x2] sm:$0x1] %v416
        %v418 = vld [vmem:[%s228 + $0x3] sm:$0x1]
        %v419 = vrot.slane %v342, 4
        %v420 = vadd.f32 %v342, %v419
        %v421 = vrot.slane %v420, 2
        %v422 = vadd.f32 %v420, %v421
        %v423 = vrot.slane %v422, 1
        %v424 = vadd.f32 %v422, %v423
        %v425 = vadd.f32 %v418, %v424
        %426 = vst [vmem:[%s228 + $0x3] sm:$0x1] %v425
        %s427 = sand.u32 %s111, 1
        %s428 = scalar_lea.sflag [#allocation4], %s427
        %s429 = sand.u32 %s111, 1
        %s430 = smul.addr %s429, 4
        %s431 = scalar_lea.vmem [#allocation7], %s430
        // Predicated region
        $region41: #{tpu_custom_call.1} parent=27 // pred_check
          %p432 = pneg %p121
        $region42: #{tpu_custom_call.1} parent=27 // pred_check_branch
          %434 = sbr.rel (%p432) target = $region44
        $region43: #{tpu_custom_call.1} parent=27 // pred_region
          %s436 = ssub.s32 64, 64
          %437 = vsyncadd %s428, %s436
          %s438 = smul.addr %s27, 2
          %s439 = sadd.s32 %s28, %s438
          %s440 = smul.addr %s439, 64
          %s441 = scalar_lea.hbm %s2, %s440
          %s443 = sshll.u32 %s431, 4
          %s444 = int_to_ptr.vmem [resolvable:$true] %s443
          %446 = dma.vmem_to_hbm [thread:$0]  %s444, 64, %s441, %s428
        $region44: #{tpu_custom_call.1} parent=27 // pred_fallthru
          _
      $region28: #{tpu_custom_call.1} parent=5 // pred_fallthru
        _
      %p447 = scmp.le.s32.totalorder 2, %s17
      // Predicated region
      $region45: #{tpu_custom_call.1} parent=5 // pred_check
        %p448 = pneg %p447
      $region46: #{tpu_custom_call.1} parent=5 // pred_check_branch
        %450 = sbr.rel (%p448) target = $region48
      $region47: #{tpu_custom_call.1} parent=5 // pred_region
        %s451 = ssub.s32 %s17, 2
        // Predicated region
        $region49: #{tpu_custom_call.1} parent=47 // pred_check
          %p452 = pneg %p127
        $region50: #{tpu_custom_call.1} parent=47 // pred_check_branch
          %454 = sbr.rel (%p452) target = $region52
        $region51: #{tpu_custom_call.1} parent=47 // pred_region
          %s455 = sand.u32 %s112, 1
          %s456 = scalar_lea.sflag [#allocation4], %s455
          %s457 = sand.u32 %s112, 1
          %s458 = smul.addr %s457, 4
          %s459 = scalar_lea.vmem [#allocation7], %s458
          %460 = dma.done %s456, 64
        $region52: #{tpu_custom_call.1} parent=47 // pred_fallthru
          _
      $region48: #{tpu_custom_call.1} parent=5 // pred_fallthru
        _
    $region6: #{tpu_custom_call.1} parent=1 // loop_footer
      %s21 = sadd.s32 1, %s17
    $region7: #{tpu_custom_call.1} parent=1 // loop_footer_branch
      %16 = sbr.rel target = $region3
    $region8: #{tpu_custom_call.1} parent=1 // loop_exit
      _
    %461 = vsyncpa [#allocation3], 1
    %s462 = scalar_lea.sflag [#allocation3], 1
    %463 = vsyncpa %s462, 1
    %464 = vsyncpa [#allocation6], 1
    %s465 = scalar_lea.sflag [#allocation6], 1
    %466 = vsyncpa %s465, 1
    %467 = vsyncpa [#allocation4], 1
    %s468 = scalar_lea.sflag [#allocation4], 1
    %469 = vsyncpa %s468, 1

</llo_original>
